<compile_context>
chip_gen: v5e
topology: v5e:2x2
jax: 0.10.0
libtpu: 0.0.40
codegen_flags: <defaults>
</compile_context>

<pallas_src>
import functools

import jax
import jax.numpy as jnp
from jax.experimental import pallas as pl
from jax.experimental.pallas import tpu as pltpu


def _cdiv(a, b):
    return -(-a // b)


def _round_up(x, m):
    return ((x + m - 1) // m) * m


def _ce_partial_kernel(logits_ref, labels_ref, loss_ref, cnt_ref):
    """One (tile_rows, C) tile of token-level cross entropy.

    logits_ref: (T, C) input dtype (bf16/f32); cast to fp32 per tile in VMEM.
    labels_ref: (T, 1) int32; -1 == ignore (also masks padded / stale rows).
    loss_ref:   (T, 1) fp32 resident accumulator (one output slot per row shard).
    cnt_ref:    (T, 1) fp32 resident accumulator of valid-row counts.
    """
    step = pl.program_id(1)

    @pl.when(step == 0)
    def _():
        loss_ref[...] = jnp.zeros_like(loss_ref)
        cnt_ref[...] = jnp.zeros_like(cnt_ref)

    logits = logits_ref[...].astype(jnp.float32)            # (T, C) fp32
    labels = labels_ref[...]                                  # (T, 1) int32

    # Numerically stable log-softmax pieces (the per-row max cancels in the loss):
    #   loss = log(sum exp(x - m)) - (x[label] - m)
    m = jnp.max(logits, axis=-1, keepdims=True)               # (T, 1)   XLU
    shifted = logits - m                                       # (T, C)   VPU

    # Gather the label logit with a one-hot compare+select (no gather on TPU).
    col = jax.lax.broadcasted_iota(jnp.int32, shifted.shape, dimension=1)
    label_shifted = jnp.sum(
        jnp.where(col == labels, shifted, 0.0), axis=-1, keepdims=True)

    lse = jnp.log(jnp.sum(jnp.exp(shifted), axis=-1, keepdims=True))  # EUP+XLU
    loss = lse - label_shifted                                 # (T, 1) per-row CE

    valid = labels != -1                                       # (T, 1) bool
    # Column-wise accumulation only; the cross-row reduction happens once,
    # outside the kernel, on the tiny (shards, T, 1) partials. NaN/Inf from
    # stale / padded rows is killed by the elementwise select below.
    loss_ref[...] += jnp.where(valid, loss, 0.0)
    cnt_ref[...] += valid.astype(jnp.float32)


def _cross_entropy_sum_count(
    logits,                       # (N, C), any float dtype (bf16 streamed as-is)
    labels,                       # (N,) int, -1 = ignore
    *,
    tile_rows=None,               # None -> auto-size from the VMEM budget
    num_row_shards=2,             # outer "parallel" grid dim (both TCs on v7x)
    vmem_budget_bytes=32 << 20,   # budget for double-buffered tile + fp32 temps
    vmem_limit_bytes=48 << 20,    # safe on v7x (64 MiB physical), ample on v5e/v6e
):
    """Returns (sum of per-row CE over valid rows, number of valid rows), fp32."""
    n, c = logits.shape
    itemsize = jnp.dtype(logits.dtype).itemsize

    if tile_rows is None:
        # 2x double-buffered input tile + ~3 fp32-sized elementwise temporaries.
        bytes_per_row = c * (2 * itemsize + 12)
        tile_rows = min(1024, max(8, (vmem_budget_bytes // bytes_per_row) // 8 * 8))
    # Never make the block taller than the (rounded-up) row count.
    tile_rows = int(max(8, min(tile_rows, _round_up(n, 8)) // 8 * 8))

    n_steps = _cdiv(n, tile_rows)                     # real logit blocks
    num_row_shards = int(max(1, min(num_row_shards, n_steps)))
    spp = _cdiv(n_steps, num_row_shards)              # steps per shard
    padded_rows = num_row_shards * spp * tile_rows

    # Only the tiny label vector gets padded (pad value -1 => ignored). Rows
    # beyond `n` (stale / clamped logit rows) are therefore always masked out.
    labels = labels.reshape(-1).astype(jnp.int32)
    labels_padded = jnp.pad(
        labels, (0, padded_rows - n), constant_values=-1
    ).reshape(padded_rows, 1)

    last_block = n_steps - 1

    def logits_map(s, i):
        # Clamp so no DMA block index is fully out of bounds; clamped duplicate
        # steps pair with all -1 labels and contribute nothing.
        return (jnp.minimum(s * spp + i, last_block), 0)

    def labels_map(s, i):
        return (s * spp + i, 0)

    def acc_map(s, i):
        return (s, 0, 0)

    loss_parts, cnt_parts = pl.pallas_call(
        _ce_partial_kernel,
        out_shape=(
            jax.ShapeDtypeStruct((num_row_shards, tile_rows, 1), jnp.float32),
            jax.ShapeDtypeStruct((num_row_shards, tile_rows, 1), jnp.float32),
        ),
        grid_spec=pltpu.PrefetchScalarGridSpec(
            num_scalar_prefetch=0,
            grid=(num_row_shards, spp),
            in_specs=[
                pl.BlockSpec((tile_rows, c), logits_map),
                pl.BlockSpec((tile_rows, 1), labels_map),
            ],
            out_specs=(
                pl.BlockSpec((None, tile_rows, 1), acc_map),
                pl.BlockSpec((None, tile_rows, 1), acc_map),
            ),
        ),
        compiler_params=pltpu.CompilerParams(
            dimension_semantics=("parallel", "arbitrary"),
            vmem_limit_bytes=vmem_limit_bytes,
        ),
    )(logits, labels_padded)

    return jnp.sum(loss_parts), jnp.sum(cnt_parts)


def _nsp_cross_entropy(nsp_logits, nsp_labels):
    """Next-sentence loss on (B, 2) logits in plain jnp (too small for Pallas)."""
    logits = nsp_logits.astype(jnp.float32)
    labels = nsp_labels.reshape(-1).astype(jnp.int32)
    m = jnp.max(logits, axis=-1, keepdims=True)
    lse = m + jnp.log(jnp.sum(jnp.exp(logits - m), axis=-1, keepdims=True))
    safe_lab = jnp.clip(labels, 0, logits.shape[-1] - 1)
    label_logit = jnp.take_along_axis(logits, safe_lab[:, None], axis=-1)
    loss = (lse - label_logit)[:, 0]
    valid = labels != -1
    return jnp.sum(jnp.where(valid, loss, 0.0)) / jnp.sum(valid.astype(jnp.float32))


@functools.partial(jax.jit, static_argnames=("vocab_size", "loss_in_fp32"))
def bert_pretraining_criterion(
    prediction_scores,        # (B, S, vocab_size), bf16 or fp32
    seq_relationship_score,   # (B, 2)
    masked_lm_labels,         # (B, S) int, -1 = ignore
    next_sentence_labels,     # (B,)  int {0, 1}
    *,
    vocab_size,
    loss_in_fp32=True,
):
    prev_dtype = prediction_scores.dtype

    # ---- masked LM loss: CrossEntropyLoss(ignore_index=-1), mean over valid ----
    # bf16 logits stream directly into the kernel; fp32 math happens per-tile,
    # numerically identical to casting the whole tensor to fp32 first.
    mlm_logits = prediction_scores.reshape(-1, vocab_size)
    mlm_labels = masked_lm_labels.reshape(-1)
    mlm_sum, mlm_cnt = _cross_entropy_sum_count(mlm_logits, mlm_labels)
    # NOTE: mlm_cnt == 0 (all labels -1) yields NaN, matching PyTorch semantics.
    masked_lm_loss = mlm_sum / mlm_cnt

    # ---- next-sentence loss: 2-class cross entropy (plain jnp, tiny) ----
    nsp_logits = seq_relationship_score.reshape(-1, 2)
    next_sentence_loss = _nsp_cross_entropy(nsp_logits, next_sentence_labels)

    total_loss = masked_lm_loss + next_sentence_loss      # fp32
    # The reference casts the scalar loss back to the activation dtype
    # (and the loss_in_fp32=False path produces that dtype natively too).
    return total_loss.astype(prev_dtype)


if __name__ == "__main__":
    # Small, BERT-pretraining-consistent shapes.
    batch, seq, vocab_size = 2, 8, 512

    key = jax.random.PRNGKey(0)
    k1, k2, k3, k4, k5 = jax.random.split(key, 5)

    # Model outputs (bf16, as in mixed-precision training; loss math runs in fp32).
    prediction_scores = jax.random.normal(
        k1, (batch, seq, vocab_size), dtype=jnp.float32
    ).astype(jnp.bfloat16)
    seq_relationship_score = jax.random.normal(
        k2, (batch, 2), dtype=jnp.float32
    ).astype(jnp.bfloat16)

    # Masked-LM labels: mostly -1 (ignored), a few real vocab ids.
    raw_labels = jax.random.randint(k3, (batch, seq), 0, vocab_size)
    mask = jax.random.bernoulli(k4, p=0.3, shape=(batch, seq))
    masked_lm_labels = jnp.where(mask, raw_labels, -1).astype(jnp.int32)
    # Guarantee at least one valid MLM label.
    masked_lm_labels = masked_lm_labels.at[0, 0].set(raw_labels[0, 0])

    next_sentence_labels = jax.random.randint(k5, (batch,), 0, 2).astype(jnp.int32)

    total_loss = bert_pretraining_criterion(
        prediction_scores,
        seq_relationship_score,
        masked_lm_labels,
        next_sentence_labels,
        vocab_size=vocab_size,
        loss_in_fp32=True,
    )
    jax.block_until_ready(total_loss)
    assert total_loss.dtype == prediction_scores.dtype
    assert jnp.isfinite(total_loss.astype(jnp.float32))
    print("KERNEL_OK")
</pallas_src>

<mosaic_0001>
module attributes {stable_mosaic.version = 11 : i64} {
  func.func @_ce_partial_kernel(%arg0: i32, %arg1: i32, %arg2: memref<16x512xbf16, #tpu.memory_space<vmem>>, %arg3: memref<16x1xi32, #tpu.memory_space<vmem>>, %arg4: memref<1x16x1xf32, #tpu.memory_space<vmem>>, %arg5: memref<1x16x1xf32, #tpu.memory_space<vmem>>) attributes {dimension_semantics = [#tpu.dimension_semantics<parallel>, #tpu.dimension_semantics<arbitrary>], iteration_bounds = array<i64: 1, 1>, scalar_prefetch = 0 : i64, scratch_operands = 0 : i64, tpu.core_type = #tpu.core_type<tc>, window_params = [{transform_indices = @transform_0, window_bounds = array<i64: 16, 512>}, {transform_indices = @transform_1, window_bounds = array<i64: 16, 1>}, {transform_indices = @transform_2, window_bounds = array<i64: 1, 16, 1>}, {transform_indices = @transform_3, window_bounds = array<i64: 1, 16, 1>}]} {
    %c0_i32 = arith.constant 0 : i32
    %0 = arith.cmpi eq, %arg1, %c0_i32 : i32
    %1 = arith.extui %0 : i1 to i32
    %c0_i32_0 = arith.constant 0 : i32
    %2 = arith.cmpi ne, %1, %c0_i32_0 : i32
    scf.if %2 {
      %cst_20 = arith.constant 0.000000e+00 : f32
      %40 = vector.broadcast %cst_20 : f32 to vector<16x1xf32>
      %c0_21 = arith.constant 0 : index
      %c0_22 = arith.constant 0 : index
      %c0_23 = arith.constant 0 : index
      %41 = vector.load %arg4[%c0_21, %c0_22, %c0_23] : memref<1x16x1xf32, #tpu.memory_space<vmem>>, vector<1x16x1xf32>
      %42 = vector.shape_cast %41 : vector<1x16x1xf32> to vector<16x1xf32>
      %43 = vector.shape_cast %40 : vector<16x1xf32> to vector<1x16x1xf32>
      tpu.vector_store %arg4[%c0_21, %c0_22, %c0_23], %43 {strides = array<i32>} : memref<1x16x1xf32, #tpu.memory_space<vmem>>, vector<1x16x1xf32>,
      %cst_24 = arith.constant 0.000000e+00 : f32
      %44 = vector.broadcast %cst_24 : f32 to vector<16x1xf32>
      %c0_25 = arith.constant 0 : index
      %c0_26 = arith.constant 0 : index
      %c0_27 = arith.constant 0 : index
      %45 = vector.load %arg5[%c0_25, %c0_26, %c0_27] : memref<1x16x1xf32, #tpu.memory_space<vmem>>, vector<1x16x1xf32>
      %46 = vector.shape_cast %45 : vector<1x16x1xf32> to vector<16x1xf32>
      %47 = vector.shape_cast %44 : vector<16x1xf32> to vector<1x16x1xf32>
      tpu.vector_store %arg5[%c0_25, %c0_26, %c0_27], %47 {strides = array<i32>} : memref<1x16x1xf32, #tpu.memory_space<vmem>>, vector<1x16x1xf32>,
    } else {
    }
    %c0 = arith.constant 0 : index
    %c0_1 = arith.constant 0 : index
    %3 = vector.load %arg2[%c0, %c0_1] : memref<16x512xbf16, #tpu.memory_space<vmem>>, vector<16x512xbf16>
    %4 = arith.extf %3 : vector<16x512xbf16> to vector<16x512xf32>
    %c0_2 = arith.constant 0 : index
    %c0_3 = arith.constant 0 : index
    %5 = vector.load %arg3[%c0_2, %c0_3] : memref<16x1xi32, #tpu.memory_space<vmem>>, vector<16x1xi32>
    %cst = arith.constant dense<0xFF800000> : vector<16xf32>
    %6 = vector.multi_reduction <maximumf>, %4, %cst [1] : vector<16x512xf32> to vector<16xf32>
    %7 = vector.shape_cast %6 : vector<16xf32> to vector<16x1xf32>
    %8 = vector.broadcast %7 : vector<16x1xf32> to vector<16x512xf32>
    %9 = arith.subf %4, %8 : vector<16x512xf32>
    %10 = tpu.iota {dimensions = array<i32: 1>} : vector<16x512xi32>
    %11 = vector.broadcast %5 : vector<16x1xi32> to vector<16x512xi32>
    %12 = arith.cmpi eq, %10, %11 : vector<16x512xi32>
    %cst_4 = arith.constant 0.000000e+00 : f32
    %13 = vector.broadcast %cst_4 : f32 to vector<16x512xf32>
    %14 = arith.select %12, %9, %13 : vector<16x512xi1>, vector<16x512xf32>
    %cst_5 = arith.constant dense<0.000000e+00> : vector<16xf32>
    %15 = vector.multi_reduction <add>, %14, %cst_5 [1] : vector<16x512xf32> to vector<16xf32>
    %16 = vector.shape_cast %15 : vector<16xf32> to vector<16x1xf32>
    %17 = math.exp %9 : vector<16x512xf32>
    %cst_6 = arith.constant dense<0.000000e+00> : vector<16xf32>
    %18 = vector.multi_reduction <add>, %17, %cst_6 [1] : vector<16x512xf32> to vector<16xf32>
    %19 = vector.shape_cast %18 : vector<16xf32> to vector<16x1xf32>
    %20 = math.log %19 : vector<16x1xf32>
    %21 = arith.subf %20, %16 : vector<16x1xf32>
    %c-1_i32 = arith.constant -1 : i32
    %22 = vector.broadcast %c-1_i32 : i32 to vector<16x1xi32>
    %23 = arith.cmpi ne, %5, %22 : vector<16x1xi32>
    %c0_7 = arith.constant 0 : index
    %c0_8 = arith.constant 0 : index
    %c0_9 = arith.constant 0 : index
    %24 = vector.load %arg4[%c0_7, %c0_8, %c0_9] : memref<1x16x1xf32, #tpu.memory_space<vmem>>, vector<1x16x1xf32>
    %25 = vector.shape_cast %24 : vector<1x16x1xf32> to vector<16x1xf32>
    %cst_10 = arith.constant 0.000000e+00 : f32
    %26 = vector.broadcast %cst_10 : f32 to vector<16x1xf32>
    %27 = arith.select %23, %21, %26 : vector<16x1xi1>, vector<16x1xf32>
    %28 = arith.addf %25, %27 : vector<16x1xf32>
    %c0_11 = arith.constant 0 : index
    %c0_12 = arith.constant 0 : index
    %c0_13 = arith.constant 0 : index
    %29 = vector.load %arg4[%c0_11, %c0_12, %c0_13] : memref<1x16x1xf32, #tpu.memory_space<vmem>>, vector<1x16x1xf32>
    %30 = vector.shape_cast %29 : vector<1x16x1xf32> to vector<16x1xf32>
    %31 = vector.shape_cast %28 : vector<16x1xf32> to vector<1x16x1xf32>
    tpu.vector_store %arg4[%c0_11, %c0_12, %c0_13], %31 {strides = array<i32>} : memref<1x16x1xf32, #tpu.memory_space<vmem>>, vector<1x16x1xf32>,
    %c0_14 = arith.constant 0 : index
    %c0_15 = arith.constant 0 : index
    %c0_16 = arith.constant 0 : index
    %32 = vector.load %arg5[%c0_14, %c0_15, %c0_16] : memref<1x16x1xf32, #tpu.memory_space<vmem>>, vector<1x16x1xf32>
    %33 = vector.shape_cast %32 : vector<1x16x1xf32> to vector<16x1xf32>
    %34 = arith.extui %23 : vector<16x1xi1> to vector<16x1xi32>
    %35 = arith.sitofp %34 : vector<16x1xi32> to vector<16x1xf32>
    %36 = arith.addf %33, %35 : vector<16x1xf32>
    %c0_17 = arith.constant 0 : index
    %c0_18 = arith.constant 0 : index
    %c0_19 = arith.constant 0 : index
    %37 = vector.load %arg5[%c0_17, %c0_18, %c0_19] : memref<1x16x1xf32, #tpu.memory_space<vmem>>, vector<1x16x1xf32>
    %38 = vector.shape_cast %37 : vector<1x16x1xf32> to vector<16x1xf32>
    %39 = vector.shape_cast %36 : vector<16x1xf32> to vector<1x16x1xf32>
    tpu.vector_store %arg5[%c0_17, %c0_18, %c0_19], %39 {strides = array<i32>} : memref<1x16x1xf32, #tpu.memory_space<vmem>>, vector<1x16x1xf32>,
    return
  }
  func.func @transform_0(%arg0: i32, %arg1: i32) -> (i32, i32) {
    %c1_i32 = arith.constant 1 : i32
    %0 = arith.muli %arg0, %c1_i32 : i32
    %1 = arith.addi %0, %arg1 : i32
    %c0_i32 = arith.constant 0 : i32
    %2 = arith.minsi %1, %c0_i32 : i32
    %c0_i32_0 = arith.constant 0 : i32
    %c0_i32_1 = arith.constant 0 : i32
    return %2, %c0_i32_0 : i32, i32
  }
  func.func @transform_1(%arg0: i32, %arg1: i32) -> (i32, i32) {
    %c1_i32 = arith.constant 1 : i32
    %0 = arith.muli %arg0, %c1_i32 : i32
    %1 = arith.addi %0, %arg1 : i32
    %c0_i32 = arith.constant 0 : i32
    %c0_i32_0 = arith.constant 0 : i32
    return %1, %c0_i32 : i32, i32
  }
  func.func @transform_2(%arg0: i32, %arg1: i32) -> (i32, i32, i32) {
    %c0_i32 = arith.constant 0 : i32
    %c0_i32_0 = arith.constant 0 : i32
    %c0_i32_1 = arith.constant 0 : i32
    return %arg0, %c0_i32, %c0_i32_0 : i32, i32, i32
  }
  func.func @transform_3(%arg0: i32, %arg1: i32) -> (i32, i32, i32) {
    %c0_i32 = arith.constant 0 : i32
    %c0_i32_0 = arith.constant 0 : i32
    %c0_i32_1 = arith.constant 0 : i32
    return %arg0, %c0_i32, %c0_i32_0 : i32, i32, i32
  }
}

</mosaic_0001>

<llo_original>
// kernel: bert_pretraining_criterion.1
$region0: #{bert_pretraining_criterion.1}
  #allocation0 [shape = 'u32[]', space=smem, size = 0x4, offset = 0x4, fixed_abs, tag = 'smem constant byte address 0x4 - core index']
  #allocation1 [shape = 'u32[72,128]{1,0:T(1,128)}', space=vmem, size = 0x9000, scoped, tag = 'internal scratch']
  %s0 = inlined_call_operand.hbm [shape: bf16[16,512], index: 0, kind: input, shape index: {}]
  %s1 = inlined_call_operand.vmem [shape: s32[16,1], index: 1, kind: input, shape index: {}]
  %s2 = inlined_call_operand.vmem [shape: f32[1,16,1], index: 2, kind: output, shape index: {0}]
  %s3 = inlined_call_operand.vmem [shape: f32[1,16,1], index: 3, kind: output, shape index: {1}]
  %4 = xla_tuple %s2, %s3
  %s5 = sld [smem:[#allocation0]]
  $region34: #{bert_pretraining_criterion.1} parent=0
    _
  %s7 = ssub.s32 1, %s5
  %s8 = scalar_select 0, %s7, %s5
  $region1: #{bert_pretraining_criterion.1} parent=0
    #allocation2 [shape = 'u8[16384]{0}', space=vmem, size = 0x4000, scoped, tag = 'input window, operand 0, single buffered']
    #allocation3 [shape = 's32[1]{0}', space=sflag, size = 0x4, scoped, tag = 'scoped memory for bert_pretraining_criterion.1']
    %9 = vsyncpa [#allocation3], 0
    // Predicated region
    $region2: #{bert_pretraining_criterion.1} parent=1 // pred_check
      _
    $region3: #{bert_pretraining_criterion.1} parent=1 // pred_check_branch
      %11 = sbr.rel (0) target = $region5
    $region4: #{bert_pretraining_criterion.1} parent=1 // pred_region
      %s12 = sadd.s32 0, 0
      %p13 = scmp.lt.s32.totalorder %s12, 0
      %s14 = scalar_select %p13, %s12, 0
      %s15 = smul.u32 2, %s14
      %17 = vsyncadd [#allocation3], 0
      %s18 = smul.addr %s15, 4
      %s19 = smul.addr %s18, 4
      %s20 = scalar_lea.hbm %s0, %s19
      %s21 = sshll.u32 %s20, 4
      %s22 = int_to_ptr.hbm [resolvable:$true] %s21
      %s23 = sshll.u32 [#allocation2], 4
      %s24 = int_to_ptr.vmem [resolvable:$true] %s23
      %29 = dma.hbm_to_vmem [thread:$0]  %s22, 512, %s24, [#allocation3], 256, 256, 16
    $region5: #{bert_pretraining_criterion.1} parent=1 // pred_fallthru
      _
    // Predicated region
    $region6: #{bert_pretraining_criterion.1} parent=1 // pred_check
      _
    $region7: #{bert_pretraining_criterion.1} parent=1 // pred_check_branch
      %31 = sbr.rel (0) target = $region9
    $region8: #{bert_pretraining_criterion.1} parent=1 // pred_region
      %s32 = sadd.s32 0, 0
      %s33 = smul.u32 2, %s32
      %p34 = scmp.lt.s32.totalorder %s33, 1
      %s35 = scalar_select %p34, %s33, 1
      %s36 = smul.addr %s35, 8
      %s37 = scalar_lea.vmem %s1, %s36
      %s38 = sadd.s32 0, 0
      %s39 = smul.u32 2, %s38
    $region9: #{bert_pretraining_criterion.1} parent=1 // pred_fallthru
      _
    // Predicated region
    $region10: #{bert_pretraining_criterion.1} parent=1 // pred_check
      _
    $region11: #{bert_pretraining_criterion.1} parent=1 // pred_check_branch
      %41 = sbr.rel (0) target = $region13
    $region12: #{bert_pretraining_criterion.1} parent=1 // pred_region
      %43 = dma.done [#allocation3], 512
    $region13: #{bert_pretraining_criterion.1} parent=1 // pred_fallthru
      _
    %s44 = sadd.s32 0, 0
    %s45 = smul.u32 2, %s44
    %p46 = scmp.lt.s32.totalorder %s45, 1
    %s47 = scalar_select %p46, %s45, 1
    %s48 = smul.addr %s47, 8
    %s49 = scalar_lea.vmem %s1, %s48
    %s50 = sadd.s32 0, 0
    %p51 = scmp.lt.s32.totalorder %s50, 0
    %s52 = scalar_select %p51, %s50, 0
    %s53 = smul.u32 2, %s52
    %s54 = sadd.s32 0, 0
    %s55 = smul.u32 2, %s54
    %p56 = scmp.lt.s32.totalorder %s55, 1
    %s57 = scalar_select %p56, %s55, 1
    %s58 = smul.addr %s57, 8
    %s59 = scalar_lea.vmem %s1, %s58
    %s60 = sadd.s32 0, 0
    %s61 = smul.u32 2, %s60
    %p62 = scmp.eq.s32.totalorder 0, 0
    // Predicated region
    $region14: #{bert_pretraining_criterion.1} parent=1 // pred_check
      %p63 = pneg %p62
    $region15: #{bert_pretraining_criterion.1} parent=1 // pred_check_branch
      %65 = sbr.rel (%p63) target = $region17
    $region16: #{bert_pretraining_criterion.1} parent=1 // pred_region
      %vm66 = vcmask 7168
      %67 = vst.msk [vmem:[%s2] sm:$0xff] %vm66, 0.0
      %68 = vst.msk [vmem:[%s2 + $0x8] sm:$0xff] %vm66, 0.0
      %69 = vst.msk [vmem:[%s3] sm:$0xff] %vm66, 0.0
      %70 = vst.msk [vmem:[%s3 + $0x8] sm:$0xff] %vm66, 0.0
    $region17: #{bert_pretraining_criterion.1} parent=1 // pred_fallthru
      _
    %v71 = vld [vmem:[#allocation2] sm:$0xff]
    %v72 = vld [vmem:[#allocation2 + $0x8] sm:$0xff]
    %v73 = vld [vmem:[#allocation2 + $0x10] sm:$0xff]
    %v74 = vld [vmem:[#allocation2 + $0x18] sm:$0xff]
    %v75 = vunpack.c.l.bf16 %v71
    %v76 = vunpack.c.h.bf16 %v71
    %v77 = vunpack.c.l.bf16 %v72
    %v78 = vunpack.c.h.bf16 %v72
    %v79 = vunpack.c.l.bf16 %v73
    %v80 = vunpack.c.h.bf16 %v73
    %v81 = vunpack.c.l.bf16 %v74
    %v82 = vunpack.c.h.bf16 %v74
    %v83 = vld [vmem:[%s59] sm:$0xff]
    %v84 = vld [vmem:[%s59 + $0x8] sm:$0xff]
    %v85 = vmax.f32 %v75, %v77
    %v86 = vmax.f32 %v76, %v78
    %v87 = vmax.f32 %v85, %v86
    %88 = vmax.xlane.f32.xlu0 %v87
    %v89 = vpop.xlane.xlu0 %88
    %v90 = vmax.f32 %v79, %v81
    %v91 = vmax.f32 %v80, %v82
    %v92 = vmax.f32 %v90, %v91
    %93 = vmax.xlane.f32.xlu0 %v92
    %v94 = vpop.xlane.xlu0 %93
    %v95 = vsub.f32 %v75, %v89
    %v96 = vsub.f32 %v76, %v89
    %v97 = vsub.f32 %v77, %v89
    %v98 = vsub.f32 %v78, %v89
    %v99 = vsub.f32 %v79, %v94
    %v100 = vsub.f32 %v80, %v94
    %v101 = vsub.f32 %v81, %v94
    %v102 = vsub.f32 %v82, %v94
    %v103 = vlaneseq
    %v104 = vand.u32 %v103, 127
    %v105 = vadd.s32 %v104, 128
    %v106 = vadd.s32 %v104, 256
    %v107 = vadd.s32 %v104, 384
    %108 = vset.pattern.permute.xlu0 0
    %109 = vperm.xlu0 %108, %v83
    %v110 = vpop.permute.xlu0 %109
    %111 = vset.pattern.permute.xlu0 0
    %112 = vperm.xlu0 %111, %v84
    %v113 = vpop.permute.xlu0 %112
    %vm114 = vcmp.eq.s32.totalorder %v104, %v110
    %vm115 = vcmp.eq.s32.totalorder %v105, %v110
    %vm116 = vcmp.eq.s32.totalorder %v106, %v110
    %vm117 = vcmp.eq.s32.totalorder %v107, %v110
    %vm118 = vcmp.eq.s32.totalorder %v104, %v113
    %vm119 = vcmp.eq.s32.totalorder %v105, %v113
    %vm120 = vcmp.eq.s32.totalorder %v106, %v113
    %vm121 = vcmp.eq.s32.totalorder %v107, %v113
    %v122 = vsel %vm114, %v95, 0.0
    %v123 = vsel %vm115, %v96, 0.0
    %v124 = vsel %vm116, %v97, 0.0
    %v125 = vsel %vm117, %v98, 0.0
    %v126 = vsel %vm118, %v99, 0.0
    %v127 = vsel %vm119, %v100, 0.0
    %v128 = vsel %vm120, %v101, 0.0
    %v129 = vsel %vm121, %v102, 0.0
    %v130 = vadd.f32 %v122, %v123
    %v131 = vadd.f32 %v130, %v124
    %v132 = vadd.f32 %v131, %v125
    %133 = vadd.xlane.f32.xlu0 %v132
    %v134 = vpop.xlane.xlu0 %133
    %v135 = vadd.f32 %v126, %v127
    %v136 = vadd.f32 %v135, %v128
    %v137 = vadd.f32 %v136, %v129
    %138 = vadd.xlane.f32.xlu0 %v137
    %v139 = vpop.xlane.xlu0 %138
    %v140 = vmul.f32 %v95, 1.442695
    %v141 = vpow.pop %v140
    %v142 = vmul.f32 %v96, 1.442695
    %v143 = vpow.pop %v142
    %v144 = vmul.f32 %v97, 1.442695
    %v145 = vpow.pop %v144
    %v146 = vmul.f32 %v98, 1.442695
    %v147 = vpow.pop %v146
    %v148 = vmul.f32 %v99, 1.442695
    %v149 = vpow.pop %v148
    %v150 = vmul.f32 %v100, 1.442695
    %v151 = vpow.pop %v150
    %v152 = vmul.f32 %v101, 1.442695
    %v153 = vpow.pop %v152
    %v154 = vmul.f32 %v102, 1.442695
    %v155 = vpow.pop %v154
    %v156 = vadd.f32 %v141, %v143
    %v157 = vadd.f32 %v156, %v145
    %v158 = vadd.f32 %v157, %v147
    %159 = vadd.xlane.f32.xlu0 %v158
    %v160 = vpop.xlane.xlu0 %159
    %v161 = vadd.f32 %v149, %v151
    %v162 = vadd.f32 %v161, %v153
    %v163 = vadd.f32 %v162, %v155
    %164 = vadd.xlane.f32.xlu0 %v163
    %v165 = vpop.xlane.xlu0 %164
    %v166 = vlog2.pop %v160
    %v167 = vmul.f32 %v166, 0.6931472
    %v168 = vlog2.pop %v165
    %v169 = vmul.f32 %v168, 0.6931472
    %v170 = vsub.f32 %v167, %v134
    %v171 = vsub.f32 %v169, %v139
    %vm172 = vcmp.ne.s32.totalorder %v83, 4294967295
    %vm173 = vcmp.ne.s32.totalorder %v84, 4294967295
    %v174 = vld [vmem:[%s2] sm:$0xff]
    %v175 = vld [vmem:[%s2 + $0x8] sm:$0xff]
    %v176 = vsel %vm172, %v170, 0.0
    %v177 = vsel %vm173, %v171, 0.0
    %v178 = vadd.f32 %v174, %v176
    %v179 = vadd.f32 %v175, %v177
    %vm180 = vcmask 7168
    %181 = vst.msk [vmem:[%s2] sm:$0xff] %vm180, %v178
    %182 = vst.msk [vmem:[%s2 + $0x8] sm:$0xff] %vm180, %v179
    %v183 = vld [vmem:[%s3] sm:$0xff]
    %v184 = vld [vmem:[%s3 + $0x8] sm:$0xff]
    %v185 = vsel %vm172, 1, 0
    %v186 = vsel %vm173, 1, 0
    %v187 = vcvt.s32.f32 %v185
    %v188 = vcvt.s32.f32 %v186
    %v189 = vadd.f32 %v183, %v187
    %v190 = vadd.f32 %v184, %v188
    %191 = vst.msk [vmem:[%s3] sm:$0xff] %vm180, %v189
    %192 = vst.msk [vmem:[%s3 + $0x8] sm:$0xff] %vm180, %v190
    // Predicated region
    $region18: #{bert_pretraining_criterion.1} parent=1 // pred_check
      _
    $region19: #{bert_pretraining_criterion.1} parent=1 // pred_check_branch
      %194 = sbr.rel (0) target = $region21
    $region20: #{bert_pretraining_criterion.1} parent=1 // pred_region
      _
    $region21: #{bert_pretraining_criterion.1} parent=1 // pred_fallthru
      _
    // Predicated region
    $region22: #{bert_pretraining_criterion.1} parent=1 // pred_check
      _
    $region23: #{bert_pretraining_criterion.1} parent=1 // pred_check_branch
      %196 = sbr.rel (0) target = $region25
    $region24: #{bert_pretraining_criterion.1} parent=1 // pred_region
      _
    $region25: #{bert_pretraining_criterion.1} parent=1 // pred_fallthru
      _
    // Predicated region
    $region26: #{bert_pretraining_criterion.1} parent=1 // pred_check
      _
    $region27: #{bert_pretraining_criterion.1} parent=1 // pred_check_branch
      %198 = sbr.rel (0) target = $region29
    $region28: #{bert_pretraining_criterion.1} parent=1 // pred_region
      _
    $region29: #{bert_pretraining_criterion.1} parent=1 // pred_fallthru
      _
    // Predicated region
    $region30: #{bert_pretraining_criterion.1} parent=1 // pred_check
      _
    $region31: #{bert_pretraining_criterion.1} parent=1 // pred_check_branch
      %200 = sbr.rel (0) target = $region33
    $region32: #{bert_pretraining_criterion.1} parent=1 // pred_region
      _
    $region33: #{bert_pretraining_criterion.1} parent=1 // pred_fallthru
      _
    %201 = vsyncpa [#allocation3], 1

</llo_original>
